<compile_context>
chip_gen: v5e
topology: v5e:2x2
jax: 0.10.0
libtpu: 0.0.40
codegen_flags: <defaults>
</compile_context>

<pallas_src>
import functools

import jax
import jax.numpy as jnp
from jax.experimental import pallas as pl
from jax.experimental.pallas import tpu as pltpu


def _round_up(a, m):
    return (a + m - 1) // m * m


# ---------------------------------------------------------------------------
# Fused kernel: LayerNorm(rows) -> Linear(dim, dim) in a single pass
# ---------------------------------------------------------------------------
def _prenorm_linear_kernel(x_ref, gb_ref, w_ref, bias_ref, o_ref, *, eps):
    x = x_ref[...].astype(jnp.float32)                       # (bm, D)
    mean = jnp.mean(x, axis=-1, keepdims=True)               # (bm, 1)
    centered = x - mean
    var = jnp.mean(centered * centered, axis=-1, keepdims=True)
    inv = jax.lax.rsqrt(var + eps)

    gb = gb_ref[...].astype(jnp.float32)                     # (2, D) resident
    normed = centered * inv * gb[0:1, :] + gb[1:2, :]        # (bm, D) f32

    w = w_ref[...]                                           # (D, Dout) resident
    acc = jnp.dot(normed.astype(w.dtype), w,
                  preferred_element_type=jnp.float32)        # (bm, Dout)
    acc = acc + bias_ref[...].astype(jnp.float32)
    o_ref[...] = acc.astype(o_ref.dtype)


def prenorm_linear_fused(x2d, gamma, beta, w, bias, *, eps=1e-5,
                         block_rows=256, vmem_budget_bytes=48 * 1024 * 1024):
    M, D = x2d.shape
    Dout = w.shape[1]

    # Row tile: multiple of 8, no larger than needed, fits the VMEM budget.
    bm = max(8, _round_up(min(block_rows, _round_up(M, 8)), 8))
    itm = x2d.dtype.itemsize

    def vmem_est(bm_):
        return (2 * bm_ * D * itm            # x double-buffer
                + 2 * bm_ * Dout * itm       # out double-buffer
                + D * Dout * w.dtype.itemsize  # resident W (constant index_map)
                + 2 * D * 4 + Dout * 4)      # gamma/beta + bias

    while bm > 8 and vmem_est(bm) > vmem_budget_bytes:
        bm = max(8, _round_up(bm // 2, 8))
    # TODO(synk): for very large D (>= 2048 f32 / 4096 bf16) add a K-tiling
    # grid axis over Din with an f32 VMEM accumulator instead of loading all
    # of W, to stay inside v7x's 64 MiB VMEM.

    Mp = _round_up(M, bm)
    xp = x2d if Mp == M else jnp.pad(x2d, ((0, Mp - M), (0, 0)))
    gb = jnp.stack([gamma, beta], axis=0)                    # (2, D)

    out = pl.pallas_call(
        functools.partial(_prenorm_linear_kernel, eps=eps),
        out_shape=jax.ShapeDtypeStruct((Mp, Dout), x2d.dtype),
        grid_spec=pltpu.PrefetchScalarGridSpec(
            num_scalar_prefetch=0,
            grid=(Mp // bm,),
            in_specs=[
                pl.BlockSpec((bm, D), lambda i: (i, 0)),
                pl.BlockSpec((2, D), lambda i: (0, 0)),
                pl.BlockSpec((D, Dout), lambda i: (0, 0)),
                pl.BlockSpec((1, Dout), lambda i: (0, 0)),
            ],
            out_specs=pl.BlockSpec((bm, Dout), lambda i: (i, 0)),
        ),
        compiler_params=pltpu.CompilerParams(
            dimension_semantics=("parallel",),
            vmem_limit_bytes=int(min(110 * 1024 * 1024,
                                     max(32 * 1024 * 1024, 2 * vmem_est(bm)))),
        ),
    )(xp, gb, w, bias.reshape(1, Dout))
    return out[:M] if Mp != M else out


# ---------------------------------------------------------------------------
# Standalone LayerNorm kernel (fallback path for arbitrary wrapped fn)
# ---------------------------------------------------------------------------
def _layernorm_kernel(x_ref, gb_ref, o_ref, *, eps):
    x = x_ref[...].astype(jnp.float32)
    mean = jnp.mean(x, axis=-1, keepdims=True)
    centered = x - mean
    var = jnp.mean(centered * centered, axis=-1, keepdims=True)
    inv = jax.lax.rsqrt(var + eps)
    gb = gb_ref[...].astype(jnp.float32)
    o_ref[...] = (centered * inv * gb[0:1, :] + gb[1:2, :]).astype(o_ref.dtype)


def layernorm_pallas(x2d, gamma, beta, *, eps=1e-5, block_rows=512):
    M, D = x2d.shape
    bm = max(8, _round_up(min(block_rows, _round_up(M, 8)), 8))
    Mp = _round_up(M, bm)
    xp = x2d if Mp == M else jnp.pad(x2d, ((0, Mp - M), (0, 0)))
    gb = jnp.stack([gamma, beta], axis=0)
    out = pl.pallas_call(
        functools.partial(_layernorm_kernel, eps=eps),
        out_shape=jax.ShapeDtypeStruct((Mp, D), x2d.dtype),
        grid_spec=pltpu.PrefetchScalarGridSpec(
            num_scalar_prefetch=0,
            grid=(Mp // bm,),
            in_specs=[
                pl.BlockSpec((bm, D), lambda i: (i, 0)),
                pl.BlockSpec((2, D), lambda i: (0, 0)),
            ],
            out_specs=pl.BlockSpec((bm, D), lambda i: (i, 0)),
        ),
        compiler_params=pltpu.CompilerParams(
            dimension_semantics=("parallel",)),
    )(xp, gb)
    return out[:M] if Mp != M else out


# ---------------------------------------------------------------------------
# PreNorm wrapper mirroring the PyTorch module: fn(norm(x))
# ---------------------------------------------------------------------------
class LinearPallas:
    """Per-token Linear(dim_in, dim_out) parameters for the fused path."""

    def __init__(self, w, b):
        self.w = w
        self.b = b

    def __call__(self, x):  # standalone (unfused) use, not needed when fused
        B, N, D = x.shape
        y = prenorm_linear_fused(  # reuse fused kernel with identity norm
            x.reshape(B * N, D),
            jnp.ones((D,), jnp.float32), jnp.zeros((D,), jnp.float32),
            self.w, self.b)
        return y.reshape(B, N, self.w.shape[1])


class PreNormPallas:
    def __init__(self, dim, fn, *, eps=1e-5):
        # nn.LayerNorm default init: weight = ones, bias = zeros
        self.gamma = jnp.ones((dim,), jnp.float32)
        self.beta = jnp.zeros((dim,), jnp.float32)
        self.eps = eps
        self.fn = fn

    def __call__(self, x, **kwargs):
        B, N, D = x.shape
        x2d = x.reshape(B * N, D)
        if isinstance(self.fn, LinearPallas) and not kwargs:
            # Fused fast path: LayerNorm + Linear in one kernel, no HBM
            # round-trip of the normalized activations.
            out = prenorm_linear_fused(x2d, self.gamma, self.beta,
                                       self.fn.w, self.fn.b, eps=self.eps)
            return out.reshape(B, N, self.fn.w.shape[1])
        normed = layernorm_pallas(x2d, self.gamma, self.beta, eps=self.eps)
        return self.fn(normed.reshape(B, N, D), **kwargs)


if __name__ == "__main__":
    # Small, lane-dense shapes: D = 128 (multiple of 128 lanes).
    B, N, D = 2, 8, 128
    key = jax.random.PRNGKey(0)
    kx, kw, kb, kg, kbt = jax.random.split(key, 5)

    x = jax.random.normal(kx, (B, N, D), dtype=jnp.float32)
    w = jax.random.normal(kw, (D, D), dtype=jnp.float32) * 0.02
    b = jax.random.normal(kb, (D,), dtype=jnp.float32) * 0.02

    prenorm = PreNormPallas(D, LinearPallas(w, b))
    # Non-trivial affine params so the LayerNorm scale/shift is actually tested.
    prenorm.gamma = 1.0 + 0.1 * jax.random.normal(kg, (D,), dtype=jnp.float32)
    prenorm.beta = 0.1 * jax.random.normal(kbt, (D,), dtype=jnp.float32)

    out = jax.block_until_ready(prenorm(x))

    # Reference: LayerNorm (affine) + Linear in plain JAX.
    mean = jnp.mean(x, axis=-1, keepdims=True)
    var = jnp.mean((x - mean) ** 2, axis=-1, keepdims=True)
    ref = (x - mean) / jnp.sqrt(var + 1e-5) * prenorm.gamma + prenorm.beta
    ref = ref @ w + b
    assert out.shape == ref.shape
    assert jnp.allclose(out, ref, atol=1e-4, rtol=1e-4), "mismatch vs reference"

    print("KERNEL_OK")
</pallas_src>

<mosaic_0001>
module attributes {stable_mosaic.version = 11 : i64} {
  func.func @_prenorm_linear_kernel(%arg0: i32, %arg1: memref<16x128xf32, #tpu.memory_space<vmem>>, %arg2: memref<2x128xf32, #tpu.memory_space<vmem>>, %arg3: memref<128x128xf32, #tpu.memory_space<vmem>>, %arg4: memref<1x128xf32, #tpu.memory_space<vmem>>, %arg5: memref<16x128xf32, #tpu.memory_space<vmem>>) attributes {dimension_semantics = [#tpu.dimension_semantics<parallel>], iteration_bounds = array<i64: 1>, scalar_prefetch = 0 : i64, scratch_operands = 0 : i64, tpu.core_type = #tpu.core_type<tc>, window_params = [{transform_indices = @transform_0, window_bounds = array<i64: 16, 128>}, {pipeline_mode = #tpu.pipeline_mode<synchronous>, transform_indices = @transform_1, window_bounds = array<i64: 2, 128>}, {pipeline_mode = #tpu.pipeline_mode<synchronous>, transform_indices = @transform_2, window_bounds = array<i64: 128, 128>}, {pipeline_mode = #tpu.pipeline_mode<synchronous>, transform_indices = @transform_3, window_bounds = array<i64: 1, 128>}, {transform_indices = @transform_4, window_bounds = array<i64: 16, 128>}]} {
    %c0 = arith.constant 0 : index
    %c0_0 = arith.constant 0 : index
    %0 = vector.load %arg1[%c0, %c0_0] : memref<16x128xf32, #tpu.memory_space<vmem>>, vector<16x128xf32>
    %cst = arith.constant dense<0.000000e+00> : vector<16xf32>
    %1 = vector.multi_reduction <add>, %0, %cst [1] : vector<16x128xf32> to vector<16xf32>
    %2 = vector.shape_cast %1 : vector<16xf32> to vector<16x1xf32>
    %cst_1 = arith.constant 1.280000e+02 : f32
    %3 = vector.broadcast %cst_1 : f32 to vector<16x1xf32>
    %4 = arith.divf %2, %3 : vector<16x1xf32>
    %5 = vector.broadcast %4 : vector<16x1xf32> to vector<16x128xf32>
    %6 = arith.subf %0, %5 : vector<16x128xf32>
    %7 = arith.mulf %6, %6 : vector<16x128xf32>
    %cst_2 = arith.constant dense<0.000000e+00> : vector<16xf32>
    %8 = vector.multi_reduction <add>, %7, %cst_2 [1] : vector<16x128xf32> to vector<16xf32>
    %9 = vector.shape_cast %8 : vector<16xf32> to vector<16x1xf32>
    %cst_3 = arith.constant 1.280000e+02 : f32
    %10 = vector.broadcast %cst_3 : f32 to vector<16x1xf32>
    %11 = arith.divf %9, %10 : vector<16x1xf32>
    %cst_4 = arith.constant 9.99999974E-6 : f32
    %12 = vector.broadcast %cst_4 : f32 to vector<16x1xf32>
    %13 = arith.addf %11, %12 : vector<16x1xf32>
    %14 = math.rsqrt %13 : vector<16x1xf32>
    %c0_5 = arith.constant 0 : index
    %c0_6 = arith.constant 0 : index
    %15 = vector.load %arg2[%c0_5, %c0_6] : memref<2x128xf32, #tpu.memory_space<vmem>>, vector<2x128xf32>
    %16 = vector.broadcast %14 : vector<16x1xf32> to vector<16x128xf32>
    %17 = arith.mulf %6, %16 : vector<16x128xf32>
    %18 = vector.extract_strided_slice %15 {offsets = [0, 0], sizes = [1, 128], strides = [1, 1]} : vector<2x128xf32> to vector<1x128xf32>
    %19 = vector.broadcast %18 : vector<1x128xf32> to vector<16x128xf32>
    %20 = arith.mulf %17, %19 : vector<16x128xf32>
    %21 = vector.extract_strided_slice %15 {offsets = [1, 0], sizes = [1, 128], strides = [1, 1]} : vector<2x128xf32> to vector<1x128xf32>
    %22 = vector.broadcast %21 : vector<1x128xf32> to vector<16x128xf32>
    %23 = arith.addf %20, %22 : vector<16x128xf32>
    %c0_7 = arith.constant 0 : index
    %c0_8 = arith.constant 0 : index
    %24 = vector.load %arg3[%c0_7, %c0_8] : memref<128x128xf32, #tpu.memory_space<vmem>>, vector<128x128xf32>
    %cst_9 = arith.constant dense<0.000000e+00> : vector<16x128xf32>
    %25 = tpu.matmul %23, %24, %cst_9 {dimension_numbers = #tpu.dot_dimension_numbers<[1], [0], [0], [1], [0, 0, 1, 1], [], []>} : vector<16x128xf32>, vector<128x128xf32>, vector<16x128xf32> -> vector<16x128xf32>
    %c0_10 = arith.constant 0 : index
    %c0_11 = arith.constant 0 : index
    %26 = vector.load %arg4[%c0_10, %c0_11] : memref<1x128xf32, #tpu.memory_space<vmem>>, vector<1x128xf32>
    %27 = vector.broadcast %26 : vector<1x128xf32> to vector<16x128xf32>
    %28 = arith.addf %25, %27 : vector<16x128xf32>
    %c0_12 = arith.constant 0 : index
    %c0_13 = arith.constant 0 : index
    %29 = vector.load %arg5[%c0_12, %c0_13] : memref<16x128xf32, #tpu.memory_space<vmem>>, vector<16x128xf32>
    tpu.vector_store %arg5[%c0_12, %c0_13], %28 {strides = array<i32>} : memref<16x128xf32, #tpu.memory_space<vmem>>, vector<16x128xf32>,
    return
  }
  func.func @transform_0(%arg0: i32) -> (i32, i32) {
    %c0_i32 = arith.constant 0 : i32
    %c0_i32_0 = arith.constant 0 : i32
    return %arg0, %c0_i32 : i32, i32
  }
  func.func @transform_1(%arg0: i32) -> (i32, i32) {
    %c0_i32 = arith.constant 0 : i32
    %c0_i32_0 = arith.constant 0 : i32
    %c0_i32_1 = arith.constant 0 : i32
    return %c0_i32, %c0_i32_0 : i32, i32
  }
  func.func @transform_2(%arg0: i32) -> (i32, i32) {
    %c0_i32 = arith.constant 0 : i32
    %c0_i32_0 = arith.constant 0 : i32
    %c0_i32_1 = arith.constant 0 : i32
    return %c0_i32, %c0_i32_0 : i32, i32
  }
  func.func @transform_3(%arg0: i32) -> (i32, i32) {
    %c0_i32 = arith.constant 0 : i32
    %c0_i32_0 = arith.constant 0 : i32
    %c0_i32_1 = arith.constant 0 : i32
    return %c0_i32, %c0_i32_0 : i32, i32
  }
  func.func @transform_4(%arg0: i32) -> (i32, i32) {
    %c0_i32 = arith.constant 0 : i32
    %c0_i32_0 = arith.constant 0 : i32
    return %arg0, %c0_i32 : i32, i32
  }
}

</mosaic_0001>

<llo_original>
// kernel: tpu_custom_call.1
$region0: #{tpu_custom_call.1}
  #allocation0 [shape = 'u32[]', space=smem, size = 0x4, offset = 0x4, fixed_abs, tag = 'smem constant byte address 0x4 - core index']
  #allocation1 [shape = 'u32[72,128]{1,0:T(1,128)}', space=vmem, size = 0x9000, scoped, tag = 'internal scratch']
  %s0 = inlined_call_operand.hbm [shape: f32[16,128], index: 0, kind: input, shape index: {}]
  %s1 = inlined_call_operand.hbm [shape: f32[2,128], index: 1, kind: input, shape index: {}]
  %s2 = inlined_call_operand.hbm [shape: f32[128,128], index: 2, kind: input, shape index: {}]
  %s3 = inlined_call_operand.vmem [shape: f32[1,128], index: 3, kind: input, shape index: {}]
  %s4 = inlined_call_operand.hbm [shape: f32[16,128], index: 4, kind: output, shape index: {}]
  %s5 = sld [smem:[#allocation0]]
  $region38: #{tpu_custom_call.1} parent=0
    _
  %s7 = ssub.s32 1, %s5
  %s8 = scalar_select 0, %s7, %s5
  $region1: #{tpu_custom_call.1} parent=0
    #allocation2 [shape = 'u8[8192]{0}', space=vmem, size = 0x2000, scoped, tag = 'input window, operand 0, single buffered']
    #allocation3 [shape = 's32[1]{0}', space=sflag, size = 0x4, scoped, tag = 'scoped memory for tpu_custom_call.1']
    #allocation4 [shape = 's32[1]{0}', space=sflag, size = 0x4, scoped, tag = 'scoped memory for tpu_custom_call.1']
    #allocation5 [shape = 'u8[1024]{0}', space=vmem, size = 0x400, scoped, tag = 'input window, operand 1, single buffered']
    #allocation6 [shape = 's32[1]{0}', space=sflag, size = 0x4, scoped, tag = 'scoped memory for tpu_custom_call.1']
    #allocation7 [shape = 'u8[65536]{0}', space=vmem, size = 0x10000, scoped, tag = 'input window, operand 2, single buffered']
    #allocation8 [shape = 'u8[8192]{0}', space=vmem, size = 0x2000, scoped, tag = 'output window, operand 0, single buffered']
    %9 = vsyncpa [#allocation3], 0
    %10 = vsyncpa [#allocation6], 0
    %11 = vsyncpa [#allocation4], 0
    // Predicated region
    $region2: #{tpu_custom_call.1} parent=1 // pred_check
      _
    $region3: #{tpu_custom_call.1} parent=1 // pred_check_branch
      %13 = sbr.rel (0) target = $region5
    $region4: #{tpu_custom_call.1} parent=1 // pred_region
      %15 = vsyncadd [#allocation3], 0
      %s16 = sshll.u32 %s0, 4
      %s17 = int_to_ptr.hbm [resolvable:$true] %s16
      %s18 = sshll.u32 [#allocation2], 4
      %s19 = int_to_ptr.vmem [resolvable:$true] %s18
      %24 = dma.hbm_to_vmem [thread:$0]  %s17, 256, %s19, [#allocation3], 128, 128, 8
    $region5: #{tpu_custom_call.1} parent=1 // pred_fallthru
      _
    // Predicated region
    $region6: #{tpu_custom_call.1} parent=1 // pred_check
      _
    $region7: #{tpu_custom_call.1} parent=1 // pred_check_branch
      %26 = sbr.rel (0) target = $region9
    $region8: #{tpu_custom_call.1} parent=1 // pred_region
      %28 = vsyncadd [#allocation6], 0
      %s30 = sshll.u32 %s1, 4
      %s31 = int_to_ptr.hbm [resolvable:$true] %s30
      %s32 = sshll.u32 [#allocation5], 4
      %s33 = int_to_ptr.vmem [resolvable:$true] %s32
      %35 = dma.hbm_to_vmem [thread:$0]  %s31, 32, %s33, [#allocation6]
    $region9: #{tpu_custom_call.1} parent=1 // pred_fallthru
      _
    // Predicated region
    $region10: #{tpu_custom_call.1} parent=1 // pred_check
      _
    $region11: #{tpu_custom_call.1} parent=1 // pred_check_branch
      %37 = sbr.rel (0) target = $region13
    $region12: #{tpu_custom_call.1} parent=1 // pred_region
      %39 = vsyncadd [#allocation6], 0
      %s40 = sshll.u32 %s2, 4
      %s41 = int_to_ptr.hbm [resolvable:$true] %s40
      %s42 = sshll.u32 [#allocation7], 4
      %s43 = int_to_ptr.vmem [resolvable:$true] %s42
      %48 = dma.hbm_to_vmem [thread:$0]  %s41, 2048, %s43, [#allocation6], 128, 128, 8
    $region13: #{tpu_custom_call.1} parent=1 // pred_fallthru
      _
    // Predicated region
    $region14: #{tpu_custom_call.1} parent=1 // pred_check
      _
    $region15: #{tpu_custom_call.1} parent=1 // pred_check_branch
      %50 = sbr.rel (0) target = $region17
    $region16: #{tpu_custom_call.1} parent=1 // pred_region
      _
    $region17: #{tpu_custom_call.1} parent=1 // pred_fallthru
      _
    // Predicated region
    $region18: #{tpu_custom_call.1} parent=1 // pred_check
      _
    $region19: #{tpu_custom_call.1} parent=1 // pred_check_branch
      %52 = sbr.rel (0) target = $region21
    $region20: #{tpu_custom_call.1} parent=1 // pred_region
      %54 = dma.done [#allocation3], 256
    $region21: #{tpu_custom_call.1} parent=1 // pred_fallthru
      _
    // Predicated region
    $region22: #{tpu_custom_call.1} parent=1 // pred_check
      _
    $region23: #{tpu_custom_call.1} parent=1 // pred_check_branch
      %56 = sbr.rel (0) target = $region25
    $region24: #{tpu_custom_call.1} parent=1 // pred_region
      %58 = dma.done [#allocation6], 32
    $region25: #{tpu_custom_call.1} parent=1 // pred_fallthru
      _
    // Predicated region
    $region26: #{tpu_custom_call.1} parent=1 // pred_check
      _
    $region27: #{tpu_custom_call.1} parent=1 // pred_check_branch
      %60 = sbr.rel (0) target = $region29
    $region28: #{tpu_custom_call.1} parent=1 // pred_region
      %62 = dma.done [#allocation6], 2048
    $region29: #{tpu_custom_call.1} parent=1 // pred_fallthru
      _
    %v63 = vld [vmem:[#allocation2] sm:$0xff]
    %v64 = vld [vmem:[#allocation2 + $0x8] sm:$0xff]
    %65 = vadd.xlane.f32.xlu0 %v63
    %v66 = vpop.xlane.xlu0 %65
    %67 = vadd.xlane.f32.xlu0 %v64
    %v68 = vpop.xlane.xlu0 %67
    %v69 = vrcp.pop 128.0
    %v70 = vmul.f32 128.0, %v69
    %v71 = vsub.f32 1.0, %v70
    %v72 = vmul.f32 %v69, %v71
    %v73 = vadd.f32 %v69, %v72
    %vm74 = vweird.f32 %v69
    %v75 = vsel %vm74, %v69, %v73
    %v76 = vmul.f32 %v66, %v75
    %v77 = vmul.f32 %v68, %v75
    %v78 = vsub.f32 %v63, %v76
    %v79 = vsub.f32 %v64, %v77
    %v80 = vmul.f32 %v78, %v78
    %v81 = vmul.f32 %v79, %v79
    %82 = vadd.xlane.f32.xlu0 %v80
    %v83 = vpop.xlane.xlu0 %82
    %84 = vadd.xlane.f32.xlu0 %v81
    %v85 = vpop.xlane.xlu0 %84
    %v86 = vmul.f32 %v83, %v75
    %v87 = vmul.f32 %v85, %v75
    %v88 = vadd.f32 %v86, 1e-05
    %v89 = vadd.f32 %v87, 1e-05
    %v90 = vrsqrt.pop %v88
    %v91 = vmul.f32 %v90, %v88
    %v92 = vmul.f32 %v91, %v90
    %v93 = vmul.f32 0.5, %v92
    %v94 = vsub.f32 1.5, %v93
    %v95 = vmul.f32 %v90, %v94
    %vm96 = vweird.f32 %v88
    %vm97 = vweird.f32 %v90
    %vm98 = vmor %vm96, %vm97
    %v99 = vsel %vm98, %v90, %v95
    %v100 = vrsqrt.pop %v89
    %v101 = vmul.f32 %v100, %v89
    %v102 = vmul.f32 %v101, %v100
    %v103 = vmul.f32 0.5, %v102
    %v104 = vsub.f32 1.5, %v103
    %v105 = vmul.f32 %v100, %v104
    %vm106 = vweird.f32 %v89
    %vm107 = vweird.f32 %v100
    %vm108 = vmor %vm106, %vm107
    %v109 = vsel %vm108, %v100, %v105
    %v110 = vld [vmem:[#allocation5] sm:$0x3]
    %v111 = vmul.f32 %v78, %v99
    %v112 = vmul.f32 %v79, %v109
    %v113 = vperm.slane %v110, 0
    %v114 = vmul.f32 %v111, %v113
    %v115 = vmul.f32 %v112, %v113
    %v116 = vperm.slane %v110, 1
    %v117 = vadd.f32 %v114, %v116
    %v118 = vadd.f32 %v115, %v116
    %v119 = vld [vmem:[#allocation7] sm:$0xff]
    %v120 = vld [vmem:[#allocation7 + $0x8] sm:$0xff]
    %v121 = vld [vmem:[#allocation7 + $0x10] sm:$0xff]
    %v122 = vld [vmem:[#allocation7 + $0x18] sm:$0xff]
    %v123 = vld [vmem:[#allocation7 + $0x20] sm:$0xff]
    %v124 = vld [vmem:[#allocation7 + $0x28] sm:$0xff]
    %v125 = vld [vmem:[#allocation7 + $0x30] sm:$0xff]
    %v126 = vld [vmem:[#allocation7 + $0x38] sm:$0xff]
    %v127 = vld [vmem:[#allocation7 + $0x40] sm:$0xff]
    %v128 = vld [vmem:[#allocation7 + $0x48] sm:$0xff]
    %v129 = vld [vmem:[#allocation7 + $0x50] sm:$0xff]
    %v130 = vld [vmem:[#allocation7 + $0x58] sm:$0xff]
    %v131 = vld [vmem:[#allocation7 + $0x60] sm:$0xff]
    %v132 = vld [vmem:[#allocation7 + $0x68] sm:$0xff]
    %v133 = vld [vmem:[#allocation7 + $0x70] sm:$0xff]
    %v134 = vld [vmem:[#allocation7 + $0x78] sm:$0xff]
    %v135 = vld [vmem:[%s3] sm:$0x1]
    %v137 = vperm.slane %v135, 0
    %139 = vmatpush.msra.mxu0 %v134
    %140 = vmatpush.msra.mxu0 %v133
    %141 = vmatpush.msra.mxu0 %v132
    %142 = vmatpush.msra.mxu0 %v131
    %143 = vmatpush.msra.mxu0 %v130
    %144 = vmatpush.msra.mxu0 %v129
    %145 = vmatpush.msra.mxu0 %v128
    %146 = vmatpush.msra.mxu0 %v127
    %147 = vmatpush.msra.mxu0 %v126
    %148 = vmatpush.msra.mxu0 %v125
    %149 = vmatpush.msra.mxu0 %v124
    %150 = vmatpush.msra.mxu0 %v123
    %151 = vmatpush.msra.mxu0 %v122
    %152 = vmatpush.msra.mxu0 %v121
    %153 = vmatpush.msra.mxu0 %v120
    %154 = vmatpush.msra.mxu0 %v119
    %155 = vmatmul.f32.gmra.mxu0 %v117
    %v156 = vpop.f32.mrf.mxu0
    %v157 = vadd.f32 %v137, %v156
    %158 = vmatmul.f32.gmra.mxu0 %v118
    %v159 = vpop.f32.mrf.mxu0
    %v160 = vadd.f32 %v137, %v159
    %161 = vdwg.mxu0
    %162 = vst [vmem:[#allocation8] sm:$0xff] %v157
    %163 = vst [vmem:[#allocation8 + $0x8] sm:$0xff] %v160
    // Predicated region
    $region30: #{tpu_custom_call.1} parent=1 // pred_check
      _
    $region31: #{tpu_custom_call.1} parent=1 // pred_check_branch
      %165 = sbr.rel (0) target = $region33
    $region32: #{tpu_custom_call.1} parent=1 // pred_region
      %167 = vsyncadd [#allocation4], 0
      %s168 = sshll.u32 [#allocation8], 4
      %s169 = int_to_ptr.vmem [resolvable:$true] %s168
      %s170 = sshll.u32 %s4, 4
      %s171 = int_to_ptr.hbm [resolvable:$true] %s170
      %176 = dma.vmem_to_hbm [thread:$0]  %s169, 256, %s171, [#allocation4], 128, 128, 8
    $region33: #{tpu_custom_call.1} parent=1 // pred_fallthru
      _
    // Predicated region
    $region34: #{tpu_custom_call.1} parent=1 // pred_check
      _
    $region35: #{tpu_custom_call.1} parent=1 // pred_check_branch
      %178 = sbr.rel (0) target = $region37
    $region36: #{tpu_custom_call.1} parent=1 // pred_region
      %180 = dma.done [#allocation4], 256
    $region37: #{tpu_custom_call.1} parent=1 // pred_fallthru
      _
    %181 = vsyncpa [#allocation3], 1
    %182 = vsyncpa [#allocation6], 1
    %183 = vsyncpa [#allocation4], 1

</llo_original>
